<compile_context>
chip_gen: v5e
topology: v5e:2x2
jax: 0.10.0
libtpu: 0.0.40
codegen_flags: <defaults>
</compile_context>

<pallas_src>
import functools

import jax
import jax.numpy as jnp
from jax.experimental import pallas as pl
from jax.experimental.pallas import tpu as pltpu


def _round_up(a, b):
    return (a + b - 1) // b * b


_VMEM_CAPACITY = None


def _vmem_capacity_bytes():
    """Per-TensorCore VMEM capacity (bytes), conservatively 64 MiB if unknown."""
    global _VMEM_CAPACITY
    if _VMEM_CAPACITY is None:
        cap = 0
        try:
            cap = int(getattr(pltpu.get_tpu_info(), "vmem_capacity_bytes", 0))
        except Exception:
            cap = 0
        _VMEM_CAPACITY = cap if cap > 0 else (64 << 20)
    return _VMEM_CAPACITY


# --------------------------------------------------------------------------- #
# Kernels.  Weight is pre-transposed to [in, out], so the contraction is the
# canonical (tm, K) @ (K, N).  Matmul accumulates in f32; residual/bias add in
# f32; store in the activation dtype.
# --------------------------------------------------------------------------- #
def _resident_kernel_bias(x_ref, w_ref, b_ref, o_ref):
    x = x_ref[...]
    y = jnp.dot(x.astype(w_ref.dtype), w_ref[...],
                preferred_element_type=jnp.float32)
    o_ref[...] = (x.astype(jnp.float32) + y + b_ref[...]).astype(o_ref.dtype)


def _resident_kernel(x_ref, w_ref, o_ref):
    x = x_ref[...]
    y = jnp.dot(x.astype(w_ref.dtype), w_ref[...],
                preferred_element_type=jnp.float32)
    o_ref[...] = (x.astype(jnp.float32) + y).astype(o_ref.dtype)


def _tiled_kernel_bias(xk_ref, xr_ref, w_ref, b_ref, o_ref):
    y = jnp.dot(xk_ref[...].astype(w_ref.dtype), w_ref[...],
                preferred_element_type=jnp.float32)
    o_ref[...] = (xr_ref[...].astype(jnp.float32) + y + b_ref[...]).astype(o_ref.dtype)


def _tiled_kernel(xk_ref, xr_ref, w_ref, o_ref):
    y = jnp.dot(xk_ref[...].astype(w_ref.dtype), w_ref[...],
                preferred_element_type=jnp.float32)
    o_ref[...] = (xr_ref[...].astype(jnp.float32) + y).astype(o_ref.dtype)


# --------------------------------------------------------------------------- #
# Forward pass.
# --------------------------------------------------------------------------- #
@functools.partial(jax.jit, static_argnames=("block_m", "block_n", "force_tiled"))
def _forward(x, w_p, b_p, *, block_m, block_n, force_tiled):
    dim = x.shape[-1]
    dim_p = w_p.shape[0]
    lead = x.shape[:-1]
    x2 = x.reshape(-1, dim)
    m = x2.shape[0]
    if dim_p != dim:
        # Feature-dim (K/N) pad to a 128 multiple: correctness-relevant, the
        # padded K columns must be zero.  M is NOT padded (cdiv grid instead).
        x2 = jnp.pad(x2, ((0, 0), (0, dim_p - dim)))

    x_item = x2.dtype.itemsize
    w_item = w_p.dtype.itemsize
    o_item = jnp.dtype(x.dtype).itemsize

    budget = int(_vmem_capacity_bytes() * 0.85)   # per-TensorCore, not per-chip
    headroom = 4 << 20                            # Mosaic internal scratch slack
    sub = {4: 8, 2: 16, 1: 32}.get(x_item, 8)     # sublane multiple for row tiles

    # ---- row tile: scale with dim so small-D cases amortize per-step cost ----
    if block_m is not None:
        tm_target = block_m
    elif dim_p <= 1024:
        tm_target = 1024
    elif dim_p <= 2048:
        tm_target = 512
    else:
        tm_target = 256
    tm = max(sub, min(_round_up(tm_target, sub), _round_up(m, sub)))

    def resident_bytes(tm_):
        # weight double-buffered allocation (only fetched once), x/o pipeline
        # buffers, f32 temporaries, plus headroom.
        return (2 * dim_p * dim_p * w_item
                + 2 * tm_ * dim_p * (x_item + o_item)
                + 2 * tm_ * dim_p * 4
                + headroom)

    use_resident = not force_tiled
    if use_resident:
        chosen = None
        for tm_try in sorted({tm, min(tm, 256), min(tm, 128), min(tm, sub)},
                             reverse=True):
            if resident_bytes(tm_try) <= budget:
                chosen = tm_try
                break
        if chosen is None:
            use_resident = False
        else:
            tm = chosen

    def compiler(sem):
        return pltpu.CompilerParams(dimension_semantics=sem,
                                    vmem_limit_bytes=budget)

    if use_resident:
        # Weight-stationary: (Dp, Dp) weight resident in VMEM, 1-D grid over M.
        grid = (pl.cdiv(m, tm),)
        x_spec = pl.BlockSpec((tm, dim_p), lambda i: (i, 0))
        w_spec = pl.BlockSpec((dim_p, dim_p), lambda i: (0, 0))   # grid-invariant
        o_spec = pl.BlockSpec((tm, dim_p), lambda i: (i, 0))
        if b_p is not None:
            b_spec = pl.BlockSpec((1, dim_p), lambda i: (0, 0))   # grid-invariant
            kernel, in_specs, operands = (_resident_kernel_bias,
                                          [x_spec, w_spec, b_spec],
                                          (x2, w_p, b_p))
        else:
            kernel, in_specs, operands = (_resident_kernel,
                                          [x_spec, w_spec], (x2, w_p))
        out = pl.pallas_call(
            kernel,
            out_shape=jax.ShapeDtypeStruct((m, dim_p), x.dtype),
            grid_spec=pltpu.PrefetchScalarGridSpec(
                num_scalar_prefetch=0, grid=grid,
                in_specs=in_specs, out_specs=o_spec),
            compiler_params=compiler(("parallel",)),
        )(*operands)
    else:
        # Large-dim path: N outer / M inner.  The (Dp, tn) weight strip is
        # grid-invariant across the inner M axis (fetched once per strip).
        tm = max(sub, min(_round_up(block_m or 256, sub), _round_up(m, sub)))

        def tiled_bytes(tm_, tn_):
            return (2 * dim_p * tn_ * w_item
                    + 2 * tm_ * dim_p * x_item
                    + 2 * tm_ * tn_ * (x_item + o_item)
                    + 2 * tm_ * tn_ * 4
                    + headroom)

        if block_n is not None:
            tn = block_n
        else:
            tn = 128
            for cand in (4096, 2048, 1024, 512, 256, 128):
                if cand <= dim_p and tiled_bytes(tm, cand) <= budget:
                    tn = cand
                    break

        grid = (pl.cdiv(dim_p, tn), pl.cdiv(m, tm))               # N outer, M inner
        xk_spec = pl.BlockSpec((tm, dim_p), lambda j, i: (i, 0))  # full-K x block
        xr_spec = pl.BlockSpec((tm, tn), lambda j, i: (i, j))     # residual slice
        w_spec = pl.BlockSpec((dim_p, tn), lambda j, i: (0, j))   # resident per strip
        o_spec = pl.BlockSpec((tm, tn), lambda j, i: (i, j))
        if b_p is not None:
            b_spec = pl.BlockSpec((1, tn), lambda j, i: (0, j))
            kernel, in_specs, operands = (_tiled_kernel_bias,
                                          [xk_spec, xr_spec, w_spec, b_spec],
                                          (x2, x2, w_p, b_p))
        else:
            kernel, in_specs, operands = (_tiled_kernel,
                                          [xk_spec, xr_spec, w_spec],
                                          (x2, x2, w_p))
        out = pl.pallas_call(
            kernel,
            out_shape=jax.ShapeDtypeStruct((m, dim_p), x.dtype),
            grid_spec=pltpu.PrefetchScalarGridSpec(
                num_scalar_prefetch=0, grid=grid,
                in_specs=in_specs, out_specs=o_spec),
            compiler_params=compiler(("arbitrary", "parallel")),
        )(*operands)

    if dim_p != dim:
        out = out[:, :dim]
    return out.reshape(*lead, dim)


class ResidualLinear:
    """y = x + x @ W^T (+ b), matching torch.nn.Linear(dim, dim, bias) semantics.

    `weight` is in nn.Linear [out, in] layout; `bias` is (dim,) or None.
    Parameter prep (cast, transpose to [in, out], pad to 128) happens ONCE here,
    not per call.  Pass compute_dtype=jnp.bfloat16 to opt into bf16-MXU matmul
    (f32 accumulation and f32 residual/bias add are kept).
    """

    def __init__(self, weight, bias=None, *, compute_dtype=None,
                 block_m=None, block_n=None, force_tiled=False):
        weight = jnp.asarray(weight)
        if weight.ndim != 2 or weight.shape[0] != weight.shape[1]:
            raise ValueError(f"weight must be square (dim, dim), got {weight.shape}")
        self.dim = int(weight.shape[0])
        self.dim_p = _round_up(self.dim, 128)
        w_dtype = jnp.dtype(compute_dtype) if compute_dtype is not None else weight.dtype
        pad = self.dim_p - self.dim
        wt = weight.astype(w_dtype).T                 # fold nn.Linear transpose once
        if pad:
            wt = jnp.pad(wt, ((0, pad), (0, pad)))
        self.w_p = wt                                 # (dim_p, dim_p), [in, out]
        if bias is not None:
            b = jnp.asarray(bias).astype(jnp.float32)  # bias add stays f32
            if pad:
                b = jnp.pad(b, ((0, pad),))
            self.b_p = b.reshape(1, self.dim_p)
        else:
            self.b_p = None
        self._block_m = block_m
        self._block_n = block_n
        self._force_tiled = bool(force_tiled)

    def __call__(self, x):
        if x.shape[-1] != self.dim:
            raise ValueError(f"expected last dim {self.dim}, got {x.shape}")
        return _forward(x, self.w_p, self.b_p,
                        block_m=self._block_m, block_n=self._block_n,
                        force_tiled=self._force_tiled)


def residual_linear(x, w, b=None, **kwargs):
    """One-shot functional form.  For repeated calls construct ResidualLinear
    once so the weight prep is not redone per call."""
    return ResidualLinear(w, b, **kwargs)(x)


if __name__ == "__main__":
    key = jax.random.PRNGKey(0)
    k_x, k_w, k_b, k_x2, k_w2, k_b2 = jax.random.split(key, 6)

    # Small shapes consistent with the module: batch=2, seq=8, hidden dim=32.
    batch, seq, dim = 2, 8, 32
    bound = 1.0 / float(dim) ** 0.5
    w = jax.random.uniform(k_w, (dim, dim), jnp.float32, -bound, bound)
    b = jax.random.uniform(k_b, (dim,), jnp.float32, -bound, bound)
    x = jax.random.normal(k_x, (batch, seq, dim), jnp.float32)

    hi = jax.lax.Precision.HIGHEST
    ref = x + (jnp.einsum("bsd,od->bso", x, w, precision=hi) + b)
    ref_nb = x + jnp.einsum("bsd,od->bso", x, w, precision=hi)

    # bias=True (resident-weight path)
    mod = ResidualLinear(w, b)
    out = mod(x)
    jax.block_until_ready(out)
    assert out.shape == x.shape and out.dtype == x.dtype
    assert jnp.allclose(out, ref, atol=1e-4, rtol=1e-4), "bias path mismatch"

    # bias=False
    out_nb = ResidualLinear(w, None)(x)
    jax.block_until_ready(out_nb)
    assert jnp.allclose(out_nb, ref_nb, atol=1e-4, rtol=1e-4), "no-bias path mismatch"

    # Opt-in bf16-MXU matmul (f32 activations, bf16 operands, f32 accumulate)
    out_bf16 = ResidualLinear(w, b, compute_dtype=jnp.bfloat16)(x)
    jax.block_until_ready(out_bf16)
    assert jnp.allclose(out_bf16, ref, atol=5e-2, rtol=5e-2), "bf16 compute path mismatch"

    # N-tiled large-dim path, forced at a small size to exercise the code.
    dim2 = 256
    bound2 = 1.0 / float(dim2) ** 0.5
    w2 = jax.random.uniform(k_w2, (dim2, dim2), jnp.float32, -bound2, bound2)
    b2 = jax.random.uniform(k_b2, (dim2,), jnp.float32, -bound2, bound2)
    x2 = jax.random.normal(k_x2, (batch, seq, dim2), jnp.float32)
    ref2 = x2 + (jnp.einsum("bsd,od->bso", x2, w2, precision=hi) + b2)
    out2 = ResidualLinear(w2, b2, block_n=128, force_tiled=True)(x2)
    jax.block_until_ready(out2)
    assert jnp.allclose(out2, ref2, atol=1e-4, rtol=1e-4), "tiled path mismatch"

    print("KERNEL_OK")
</pallas_src>

<mosaic_0001>
module attributes {stable_mosaic.version = 11 : i64} {
  func.func @_resident_kernel_bias(%arg0: i32, %arg1: memref<16x128xf32, #tpu.memory_space<vmem>>, %arg2: memref<128x128xf32, #tpu.memory_space<vmem>>, %arg3: memref<1x128xf32, #tpu.memory_space<vmem>>, %arg4: memref<16x128xf32, #tpu.memory_space<vmem>>) attributes {dimension_semantics = [#tpu.dimension_semantics<parallel>], iteration_bounds = array<i64: 1>, scalar_prefetch = 0 : i64, scratch_operands = 0 : i64, tpu.core_type = #tpu.core_type<tc>, window_params = [{transform_indices = @transform_0, window_bounds = array<i64: 16, 128>}, {pipeline_mode = #tpu.pipeline_mode<synchronous>, transform_indices = @transform_1, window_bounds = array<i64: 128, 128>}, {pipeline_mode = #tpu.pipeline_mode<synchronous>, transform_indices = @transform_2, window_bounds = array<i64: 1, 128>}, {transform_indices = @transform_3, window_bounds = array<i64: 16, 128>}]} {
    %c0 = arith.constant 0 : index
    %c0_0 = arith.constant 0 : index
    %0 = vector.load %arg1[%c0, %c0_0] : memref<16x128xf32, #tpu.memory_space<vmem>>, vector<16x128xf32>
    %c0_1 = arith.constant 0 : index
    %c0_2 = arith.constant 0 : index
    %1 = vector.load %arg2[%c0_1, %c0_2] : memref<128x128xf32, #tpu.memory_space<vmem>>, vector<128x128xf32>
    %cst = arith.constant dense<0.000000e+00> : vector<16x128xf32>
    %2 = tpu.matmul %0, %1, %cst {dimension_numbers = #tpu.dot_dimension_numbers<[1], [0], [0], [1], [0, 0, 1, 1], [], []>} : vector<16x128xf32>, vector<128x128xf32>, vector<16x128xf32> -> vector<16x128xf32>
    %3 = arith.addf %0, %2 : vector<16x128xf32>
    %c0_3 = arith.constant 0 : index
    %c0_4 = arith.constant 0 : index
    %4 = vector.load %arg3[%c0_3, %c0_4] : memref<1x128xf32, #tpu.memory_space<vmem>>, vector<1x128xf32>
    %5 = vector.broadcast %4 : vector<1x128xf32> to vector<16x128xf32>
    %6 = arith.addf %3, %5 : vector<16x128xf32>
    %c0_5 = arith.constant 0 : index
    %c0_6 = arith.constant 0 : index
    %7 = vector.load %arg4[%c0_5, %c0_6] : memref<16x128xf32, #tpu.memory_space<vmem>>, vector<16x128xf32>
    tpu.vector_store %arg4[%c0_5, %c0_6], %6 {strides = array<i32>} : memref<16x128xf32, #tpu.memory_space<vmem>>, vector<16x128xf32>,
    return
  }
  func.func @transform_0(%arg0: i32) -> (i32, i32) {
    %c0_i32 = arith.constant 0 : i32
    %c0_i32_0 = arith.constant 0 : i32
    return %arg0, %c0_i32 : i32, i32
  }
  func.func @transform_1(%arg0: i32) -> (i32, i32) {
    %c0_i32 = arith.constant 0 : i32
    %c0_i32_0 = arith.constant 0 : i32
    %c0_i32_1 = arith.constant 0 : i32
    return %c0_i32, %c0_i32_0 : i32, i32
  }
  func.func @transform_2(%arg0: i32) -> (i32, i32) {
    %c0_i32 = arith.constant 0 : i32
    %c0_i32_0 = arith.constant 0 : i32
    %c0_i32_1 = arith.constant 0 : i32
    return %c0_i32, %c0_i32_0 : i32, i32
  }
  func.func @transform_3(%arg0: i32) -> (i32, i32) {
    %c0_i32 = arith.constant 0 : i32
    %c0_i32_0 = arith.constant 0 : i32
    return %arg0, %c0_i32 : i32, i32
  }
}

</mosaic_0001>

<llo_original>
// kernel: _forward.1
$region0: #{_forward.1}
  #allocation0 [shape = 'u32[]', space=smem, size = 0x4, offset = 0x4, fixed_abs, tag = 'smem constant byte address 0x4 - core index']
  #allocation1 [shape = 'u32[72,128]{1,0:T(1,128)}', space=vmem, size = 0x9000, scoped, tag = 'internal scratch']
  %s0 = inlined_call_operand.vmem [shape: f32[16,128], index: 0, kind: input, shape index: {}]
  %s1 = inlined_call_operand.hbm [shape: f32[128,128], index: 1, kind: input, shape index: {}]
  %s2 = inlined_call_operand.vmem [shape: f32[1,128], index: 2, kind: input, shape index: {}]
  %s3 = inlined_call_operand.vmem [shape: f32[16,128], index: 3, kind: output, shape index: {}]
  %s4 = sld [smem:[#allocation0]]
  $region26: #{_forward.1} parent=0
    _
  %s6 = ssub.s32 1, %s4
  %s7 = scalar_select 0, %s6, %s4
  $region1: #{_forward.1} parent=0
    #allocation2 [shape = 'u8[65536]{0}', space=vmem, size = 0x10000, scoped, tag = 'input window, operand 1, single buffered']
    #allocation3 [shape = 's32[1]{0}', space=sflag, size = 0x4, scoped, tag = 'scoped memory for _forward.1']
    %8 = vsyncpa [#allocation3], 0
    // Predicated region
    $region2: #{_forward.1} parent=1 // pred_check
      _
    $region3: #{_forward.1} parent=1 // pred_check_branch
      %10 = sbr.rel (0) target = $region5
    $region4: #{_forward.1} parent=1 // pred_region
      _
    $region5: #{_forward.1} parent=1 // pred_fallthru
      _
    // Predicated region
    $region6: #{_forward.1} parent=1 // pred_check
      _
    $region7: #{_forward.1} parent=1 // pred_check_branch
      %12 = sbr.rel (0) target = $region9
    $region8: #{_forward.1} parent=1 // pred_region
      %14 = vsyncadd [#allocation3], 0
      %s15 = sshll.u32 %s1, 4
      %s16 = int_to_ptr.hbm [resolvable:$true] %s15
      %s17 = sshll.u32 [#allocation2], 4
      %s18 = int_to_ptr.vmem [resolvable:$true] %s17
      %23 = dma.hbm_to_vmem [thread:$0]  %s16, 2048, %s18, [#allocation3], 128, 128, 8
    $region9: #{_forward.1} parent=1 // pred_fallthru
      _
    // Predicated region
    $region10: #{_forward.1} parent=1 // pred_check
      _
    $region11: #{_forward.1} parent=1 // pred_check_branch
      %25 = sbr.rel (0) target = $region13
    $region12: #{_forward.1} parent=1 // pred_region
      _
    $region13: #{_forward.1} parent=1 // pred_fallthru
      _
    // Predicated region
    $region14: #{_forward.1} parent=1 // pred_check
      _
    $region15: #{_forward.1} parent=1 // pred_check_branch
      %27 = sbr.rel (0) target = $region17
    $region16: #{_forward.1} parent=1 // pred_region
      %29 = dma.done [#allocation3], 2048
    $region17: #{_forward.1} parent=1 // pred_fallthru
      _
    %v30 = vld [vmem:[%s0] sm:$0xff]
    %v31 = vld [vmem:[%s0 + $0x8] sm:$0xff]
    %v32 = vld [vmem:[#allocation2] sm:$0xff]
    %v33 = vld [vmem:[#allocation2 + $0x8] sm:$0xff]
    %v34 = vld [vmem:[#allocation2 + $0x10] sm:$0xff]
    %v35 = vld [vmem:[#allocation2 + $0x18] sm:$0xff]
    %v36 = vld [vmem:[#allocation2 + $0x20] sm:$0xff]
    %v37 = vld [vmem:[#allocation2 + $0x28] sm:$0xff]
    %v38 = vld [vmem:[#allocation2 + $0x30] sm:$0xff]
    %v39 = vld [vmem:[#allocation2 + $0x38] sm:$0xff]
    %v40 = vld [vmem:[#allocation2 + $0x40] sm:$0xff]
    %v41 = vld [vmem:[#allocation2 + $0x48] sm:$0xff]
    %v42 = vld [vmem:[#allocation2 + $0x50] sm:$0xff]
    %v43 = vld [vmem:[#allocation2 + $0x58] sm:$0xff]
    %v44 = vld [vmem:[#allocation2 + $0x60] sm:$0xff]
    %v45 = vld [vmem:[#allocation2 + $0x68] sm:$0xff]
    %v46 = vld [vmem:[#allocation2 + $0x70] sm:$0xff]
    %v47 = vld [vmem:[#allocation2 + $0x78] sm:$0xff]
    %48 = vmatpush.msra.mxu0 %v47
    %49 = vmatpush.msra.mxu0 %v46
    %50 = vmatpush.msra.mxu0 %v45
    %51 = vmatpush.msra.mxu0 %v44
    %52 = vmatpush.msra.mxu0 %v43
    %53 = vmatpush.msra.mxu0 %v42
    %54 = vmatpush.msra.mxu0 %v41
    %55 = vmatpush.msra.mxu0 %v40
    %56 = vmatpush.msra.mxu0 %v39
    %57 = vmatpush.msra.mxu0 %v38
    %58 = vmatpush.msra.mxu0 %v37
    %59 = vmatpush.msra.mxu0 %v36
    %60 = vmatpush.msra.mxu0 %v35
    %61 = vmatpush.msra.mxu0 %v34
    %62 = vmatpush.msra.mxu0 %v33
    %63 = vmatpush.msra.mxu0 %v32
    %64 = vmatmul.f32.gmra.mxu0 %v30
    %v65 = vpop.f32.mrf.mxu0
    %v66 = vadd.f32 0.0, %v65
    %67 = vmatmul.f32.gmra.mxu0 %v31
    %v68 = vpop.f32.mrf.mxu0
    %v69 = vadd.f32 0.0, %v68
    %70 = vdwg.mxu0
    %v71 = vadd.f32 %v30, %v66
    %v72 = vadd.f32 %v31, %v69
    %v73 = vld [vmem:[%s2] sm:$0x1]
    %v75 = vperm.slane %v73, 0
    %v77 = vadd.f32 %v71, %v75
    %v78 = vadd.f32 %v72, %v75
    %79 = vst [vmem:[%s3] sm:$0xff] %v77
    %80 = vst [vmem:[%s3 + $0x8] sm:$0xff] %v78
    // Predicated region
    $region18: #{_forward.1} parent=1 // pred_check
      _
    $region19: #{_forward.1} parent=1 // pred_check_branch
      %82 = sbr.rel (0) target = $region21
    $region20: #{_forward.1} parent=1 // pred_region
      _
    $region21: #{_forward.1} parent=1 // pred_fallthru
      _
    // Predicated region
    $region22: #{_forward.1} parent=1 // pred_check
      _
    $region23: #{_forward.1} parent=1 // pred_check_branch
      %84 = sbr.rel (0) target = $region25
    $region24: #{_forward.1} parent=1 // pred_region
      _
    $region25: #{_forward.1} parent=1 // pred_fallthru
      _
    %85 = vsyncpa [#allocation3], 1

</llo_original>
